<compile_context>
chip_gen: v7x
topology: tpu7x:2x2x1
jax: 0.10.0
libtpu: 0.0.40
codegen_flags: <defaults>
</compile_context>

<pallas_src>
import functools

import jax
import jax.numpy as jnp
from jax.experimental import pallas as pl
from jax.experimental.pallas import tpu as pltpu


def _round_up(n, m):
    return ((n + m - 1) // m) * m


def _mlp_kernel(x_ref, w1_ref, b1_ref, w2_ref, b2_ref, w3_ref, b3_ref, o_ref):
    # Fused 3-layer MLP on one batch tile.  Matmuls accumulate in f32 on the
    # MXU; bias-add / ReLU run on the VPU in f32 (biases pre-cast to f32).
    h1 = jnp.dot(x_ref[...], w1_ref[...], preferred_element_type=jnp.float32)
    h1 = jnp.maximum(h1 + b1_ref[...], 0.0)

    h2 = jnp.dot(h1.astype(w2_ref.dtype), w2_ref[...],
                 preferred_element_type=jnp.float32)
    h2 = jnp.maximum(h2 + b2_ref[...], 0.0)

    y = jnp.dot(h2.astype(w3_ref.dtype), w3_ref[...],
                preferred_element_type=jnp.float32)
    y = y + b3_ref[...]

    o_ref[...] = y.astype(o_ref.dtype)  # lane-dense (bb, out_pad) store


def init_params(key, input_size, hidden_size, output_size, dtype=jnp.float32):
    """nn.Linear-style init: U(-1/sqrt(fan_in), 1/sqrt(fan_in)).
    Weights stored pre-transposed as (in_features, out_features); bias (1, out)."""
    def linear(k, fan_in, fan_out):
        kw, kb = jax.random.split(k)
        bound = 1.0 / jnp.sqrt(fan_in)
        w = jax.random.uniform(kw, (fan_in, fan_out), dtype, -bound, bound)
        b = jax.random.uniform(kb, (1, fan_out), dtype, -bound, bound)
        return w, b

    k1, k2, k3 = jax.random.split(key, 3)
    w1, b1 = linear(k1, input_size, hidden_size)
    w2, b2 = linear(k2, hidden_size, hidden_size)
    w3, b3 = linear(k3, hidden_size, output_size)
    return w1, b1, w2, b2, w3, b3


def prepare_params(w1, b1, w2, b2, w3, b3):
    """Pad hidden/output feature dims to 128 lanes ONCE (outside the forward).
    w1 keeps its unpadded K rows so x needs no feature padding; zero-padded
    weight columns + zero bias -> relu(0)=0 in pad lanes, so results are exact.
    Biases are pre-cast to f32 (kernel epilogue runs in f32)."""
    in_size, hidden = w1.shape
    out_size = w3.shape[1]
    hid_p = _round_up(hidden, 128)
    out_p = _round_up(out_size, 128)

    w1p = jnp.pad(w1, ((0, 0), (0, hid_p - hidden)))
    w2p = jnp.pad(w2, ((0, hid_p - hidden), (0, hid_p - hidden)))
    w3p = jnp.pad(w3, ((0, hid_p - hidden), (0, out_p - out_size)))
    b1p = jnp.pad(b1, ((0, 0), (0, hid_p - hidden))).astype(jnp.float32)
    b2p = jnp.pad(b2, ((0, 0), (0, hid_p - hidden))).astype(jnp.float32)
    b3p = jnp.pad(b3, ((0, 0), (0, out_p - out_size))).astype(jnp.float32)
    return w1p, b1p, w2p, b2p, w3p, b3p


@functools.partial(jax.jit, static_argnames=("out_size", "block_batch"))
def mlp_forward(x, w1p, b1p, w2p, b2p, w3p, b3p, *, out_size, block_batch=1024):
    """x: (B, input_size); pre-padded params from prepare_params().
    Returns (B, out_size)."""
    B, in_size = x.shape
    hid_p = w1p.shape[1]
    out_p = w3p.shape[1]
    assert w1p.shape[0] == in_size, "w1 rows must match x features (unpadded K)"

    # Batch tile: large (amortize ~0.35us/step pipeline overhead), multiple of
    # 8 sublanes, but never more than half the batch so the grid has >= 2
    # steps for v7x's 2 TensorCores to share the "parallel" axis.
    bb = min(block_batch, max(8, _round_up(pl.cdiv(B, 2), 8)))
    grid = (pl.cdiv(B, bb),)  # ragged last block: Pallas masks the OOB output rows

    # Weights & biases: whole-array blocks, constant index_map -> resident.
    full = lambda a: pl.BlockSpec(a.shape, lambda i: (0, 0))

    # --- VMEM footprint -> explicit vmem_limit (default is 16/32 MiB scoped) ---
    itemsize = jnp.dtype(x.dtype).itemsize
    in_vmem = _round_up(in_size, 128)          # VMEM lane padding of the x tile

    def vmem_elems(shape):                     # (8,128) tile padding in VMEM
        r, c = shape
        return _round_up(max(r, 1), 8) * _round_up(c, 128)

    w_bytes = sum(vmem_elems(w.shape) * jnp.dtype(w.dtype).itemsize
                  for w in (w1p, w2p, w3p))
    b_bytes = sum(vmem_elems(b.shape) * 4 for b in (b1p, b2p, b3p))
    vmem_bytes = (
        2 * bb * in_vmem * itemsize            # x tile, double-buffered
        + 2 * bb * out_p * itemsize            # out tile, double-buffered
        + 2 * (w_bytes + b_bytes)              # resident weights/biases (conservative 2x)
        + 2 * bb * hid_p * 4                   # h1, h2 f32 temporaries
        + bb * out_p * 4                       # y f32 before downcast
    )
    vmem_limit = min(max(2 * int(vmem_bytes), 32 << 20), 64 << 20)

    flops = 2 * B * (in_size * hid_p + hid_p * hid_p + hid_p * out_p)
    bytes_accessed = itemsize * (
        B * in_size + B * out_p
        + in_size * hid_p + hid_p * hid_p + hid_p * out_p
    ) + 4 * (2 * hid_p + out_p)

    out = pl.pallas_call(
        _mlp_kernel,
        out_shape=jax.ShapeDtypeStruct((B, out_p), x.dtype),
        grid_spec=pltpu.PrefetchScalarGridSpec(
            num_scalar_prefetch=0,
            grid=grid,
            in_specs=[
                # x block: last dim == full array dim (true in_size, no 128 pad)
                pl.BlockSpec((bb, in_size), lambda i: (i, 0)),
                full(w1p), full(b1p),
                full(w2p), full(b2p),
                full(w3p), full(b3p),
            ],
            out_specs=pl.BlockSpec((bb, out_p), lambda i: (i, 0)),
        ),
        compiler_params=pltpu.CompilerParams(
            dimension_semantics=("parallel",),   # v7x: shard batch tiles over 2 TCs
            vmem_limit_bytes=vmem_limit,
        ),
        cost_estimate=pl.CostEstimate(
            flops=int(flops), transcendentals=0, bytes_accessed=int(bytes_accessed)
        ),
    )(x, w1p, b1p, w2p, b2p, w3p, b3p)

    return out[:, :out_size]   # strip lane padding on the output features


def reference_forward(x, w1, b1, w2, b2, w3, b3):
    h1 = jnp.maximum(x @ w1 + b1, 0.0)
    h2 = jnp.maximum(h1 @ w2 + b2, 0.0)
    return h2 @ w3 + b3


if __name__ == "__main__":
    input_size, hidden_size, output_size = 16, 32, 4
    batch = 16

    key = jax.random.PRNGKey(0)
    kx, kp = jax.random.split(key)
    x = jax.random.normal(kx, (batch, input_size), jnp.float32)
    raw_params = init_params(kp, input_size, hidden_size, output_size)
    padded_params = prepare_params(*raw_params)   # pad once, outside the forward

    out = mlp_forward(x, *padded_params, out_size=output_size, block_batch=1024)
    out = jax.block_until_ready(out)

    ref = reference_forward(x, *raw_params)
    assert out.shape == (batch, output_size), out.shape
    assert jnp.allclose(out, ref, atol=1e-5, rtol=1e-5), "mismatch vs reference"

    print("KERNEL_OK")
</pallas_src>

<mosaic_0001>
module attributes {stable_mosaic.version = 11 : i64} {
  func.func @_mlp_kernel(%arg0: i32, %arg1: memref<8x16xf32, #tpu.memory_space<vmem>>, %arg2: memref<16x128xf32, #tpu.memory_space<vmem>>, %arg3: memref<1x128xf32, #tpu.memory_space<vmem>>, %arg4: memref<128x128xf32, #tpu.memory_space<vmem>>, %arg5: memref<1x128xf32, #tpu.memory_space<vmem>>, %arg6: memref<128x128xf32, #tpu.memory_space<vmem>>, %arg7: memref<1x128xf32, #tpu.memory_space<vmem>>, %arg8: memref<8x128xf32, #tpu.memory_space<vmem>>) attributes {dimension_semantics = [#tpu.dimension_semantics<parallel>], iteration_bounds = array<i64: 2>, scalar_prefetch = 0 : i64, scratch_operands = 0 : i64, tpu.core_type = #tpu.core_type<tc>, window_params = [{transform_indices = @transform_0, window_bounds = array<i64: 8, 16>}, {pipeline_mode = #tpu.pipeline_mode<synchronous>, transform_indices = @transform_1, window_bounds = array<i64: 16, 128>}, {pipeline_mode = #tpu.pipeline_mode<synchronous>, transform_indices = @transform_2, window_bounds = array<i64: 1, 128>}, {pipeline_mode = #tpu.pipeline_mode<synchronous>, transform_indices = @transform_3, window_bounds = array<i64: 128, 128>}, {pipeline_mode = #tpu.pipeline_mode<synchronous>, transform_indices = @transform_4, window_bounds = array<i64: 1, 128>}, {pipeline_mode = #tpu.pipeline_mode<synchronous>, transform_indices = @transform_5, window_bounds = array<i64: 128, 128>}, {pipeline_mode = #tpu.pipeline_mode<synchronous>, transform_indices = @transform_6, window_bounds = array<i64: 1, 128>}, {transform_indices = @transform_7, window_bounds = array<i64: 8, 128>}]} {
    %c0 = arith.constant 0 : index
    %c0_0 = arith.constant 0 : index
    %0 = vector.load %arg1[%c0, %c0_0] : memref<8x16xf32, #tpu.memory_space<vmem>>, vector<8x16xf32>
    %c0_1 = arith.constant 0 : index
    %c0_2 = arith.constant 0 : index
    %1 = vector.load %arg2[%c0_1, %c0_2] : memref<16x128xf32, #tpu.memory_space<vmem>>, vector<16x128xf32>
    %cst = arith.constant dense<0.000000e+00> : vector<8x128xf32>
    %2 = tpu.matmul %0, %1, %cst {dimension_numbers = #tpu.dot_dimension_numbers<[1], [0], [0], [1], [0, 0, 1, 1], [], []>} : vector<8x16xf32>, vector<16x128xf32>, vector<8x128xf32> -> vector<8x128xf32>
    %c0_3 = arith.constant 0 : index
    %c0_4 = arith.constant 0 : index
    %3 = vector.load %arg3[%c0_3, %c0_4] : memref<1x128xf32, #tpu.memory_space<vmem>>, vector<1x128xf32>
    %4 = vector.broadcast %3 : vector<1x128xf32> to vector<8x128xf32>
    %5 = arith.addf %2, %4 : vector<8x128xf32>
    %cst_5 = arith.constant 0.000000e+00 : f32
    %6 = vector.broadcast %cst_5 : f32 to vector<8x128xf32>
    %7 = arith.maximumf %5, %6 : vector<8x128xf32>
    %c0_6 = arith.constant 0 : index
    %c0_7 = arith.constant 0 : index
    %8 = vector.load %arg4[%c0_6, %c0_7] : memref<128x128xf32, #tpu.memory_space<vmem>>, vector<128x128xf32>
    %cst_8 = arith.constant dense<0.000000e+00> : vector<8x128xf32>
    %9 = tpu.matmul %7, %8, %cst_8 {dimension_numbers = #tpu.dot_dimension_numbers<[1], [0], [0], [1], [0, 0, 1, 1], [], []>} : vector<8x128xf32>, vector<128x128xf32>, vector<8x128xf32> -> vector<8x128xf32>
    %c0_9 = arith.constant 0 : index
    %c0_10 = arith.constant 0 : index
    %10 = vector.load %arg5[%c0_9, %c0_10] : memref<1x128xf32, #tpu.memory_space<vmem>>, vector<1x128xf32>
    %11 = vector.broadcast %10 : vector<1x128xf32> to vector<8x128xf32>
    %12 = arith.addf %9, %11 : vector<8x128xf32>
    %cst_11 = arith.constant 0.000000e+00 : f32
    %13 = vector.broadcast %cst_11 : f32 to vector<8x128xf32>
    %14 = arith.maximumf %12, %13 : vector<8x128xf32>
    %c0_12 = arith.constant 0 : index
    %c0_13 = arith.constant 0 : index
    %15 = vector.load %arg6[%c0_12, %c0_13] : memref<128x128xf32, #tpu.memory_space<vmem>>, vector<128x128xf32>
    %cst_14 = arith.constant dense<0.000000e+00> : vector<8x128xf32>
    %16 = tpu.matmul %14, %15, %cst_14 {dimension_numbers = #tpu.dot_dimension_numbers<[1], [0], [0], [1], [0, 0, 1, 1], [], []>} : vector<8x128xf32>, vector<128x128xf32>, vector<8x128xf32> -> vector<8x128xf32>
    %c0_15 = arith.constant 0 : index
    %c0_16 = arith.constant 0 : index
    %17 = vector.load %arg7[%c0_15, %c0_16] : memref<1x128xf32, #tpu.memory_space<vmem>>, vector<1x128xf32>
    %18 = vector.broadcast %17 : vector<1x128xf32> to vector<8x128xf32>
    %19 = arith.addf %16, %18 : vector<8x128xf32>
    %c0_17 = arith.constant 0 : index
    %c0_18 = arith.constant 0 : index
    %20 = vector.load %arg8[%c0_17, %c0_18] : memref<8x128xf32, #tpu.memory_space<vmem>>, vector<8x128xf32>
    tpu.vector_store %arg8[%c0_17, %c0_18], %19 {strides = array<i32>} : memref<8x128xf32, #tpu.memory_space<vmem>>, vector<8x128xf32>,
    return
  }
  func.func @transform_0(%arg0: i32) -> (i32, i32) {
    %c0_i32 = arith.constant 0 : i32
    %c0_i32_0 = arith.constant 0 : i32
    return %arg0, %c0_i32 : i32, i32
  }
  func.func @transform_1(%arg0: i32) -> (i32, i32) {
    %c0_i32 = arith.constant 0 : i32
    %c0_i32_0 = arith.constant 0 : i32
    %c0_i32_1 = arith.constant 0 : i32
    return %c0_i32, %c0_i32_0 : i32, i32
  }
  func.func @transform_2(%arg0: i32) -> (i32, i32) {
    %c0_i32 = arith.constant 0 : i32
    %c0_i32_0 = arith.constant 0 : i32
    %c0_i32_1 = arith.constant 0 : i32
    return %c0_i32, %c0_i32_0 : i32, i32
  }
  func.func @transform_3(%arg0: i32) -> (i32, i32) {
    %c0_i32 = arith.constant 0 : i32
    %c0_i32_0 = arith.constant 0 : i32
    %c0_i32_1 = arith.constant 0 : i32
    return %c0_i32, %c0_i32_0 : i32, i32
  }
  func.func @transform_4(%arg0: i32) -> (i32, i32) {
    %c0_i32 = arith.constant 0 : i32
    %c0_i32_0 = arith.constant 0 : i32
    %c0_i32_1 = arith.constant 0 : i32
    return %c0_i32, %c0_i32_0 : i32, i32
  }
  func.func @transform_5(%arg0: i32) -> (i32, i32) {
    %c0_i32 = arith.constant 0 : i32
    %c0_i32_0 = arith.constant 0 : i32
    %c0_i32_1 = arith.constant 0 : i32
    return %c0_i32, %c0_i32_0 : i32, i32
  }
  func.func @transform_6(%arg0: i32) -> (i32, i32) {
    %c0_i32 = arith.constant 0 : i32
    %c0_i32_0 = arith.constant 0 : i32
    %c0_i32_1 = arith.constant 0 : i32
    return %c0_i32, %c0_i32_0 : i32, i32
  }
  func.func @transform_7(%arg0: i32) -> (i32, i32) {
    %c0_i32 = arith.constant 0 : i32
    %c0_i32_0 = arith.constant 0 : i32
    return %arg0, %c0_i32 : i32, i32
  }
}

</mosaic_0001>

<llo_original>
// kernel: mlp_forward.1
$region0: #{mlp_forward.1}
  #allocation0 [shape = 'u32[]', space=smem, size = 0x4, offset = 0x4, fixed_abs, tag = 'smem constant byte address 0x4 - core index']
  #allocation1 [shape = 'u32[144,128]{1,0:T(1,128)}', space=vmem, size = 0x12000, scoped, tag = 'internal scratch']
  %s0 = inlined_call_operand.hbm [shape: f32[16,16], index: 0, kind: input, shape index: {}]
  %s1 = inlined_call_operand.hbm [shape: f32[16,128], index: 1, kind: input, shape index: {}]
  %s2 = inlined_call_operand.vmem [shape: f32[1,128], index: 2, kind: input, shape index: {}]
  %s3 = inlined_call_operand.hbm [shape: f32[128,128], index: 3, kind: input, shape index: {}]
  %s4 = inlined_call_operand.vmem [shape: f32[1,128], index: 4, kind: input, shape index: {}]
  %s5 = inlined_call_operand.hbm [shape: f32[128,128], index: 5, kind: input, shape index: {}]
  %s6 = inlined_call_operand.vmem [shape: f32[1,128], index: 6, kind: input, shape index: {}]
  %s7 = inlined_call_operand.vmem [shape: f32[16,128], index: 7, kind: output, shape index: {}]
  %s8 = sld [smem:[#allocation0]]
  $region77: #{mlp_forward.1} parent=0
    _
  %s10 = ssub.s32 1, %s8
  %s11 = scalar_select 0, %s10, %s8
  $region1: #{mlp_forward.1} parent=0
    #allocation2 [shape = 'u8[8192]{0}', space=vmem, size = 0x2000, scoped, tag = 'input window, operand 0']
    #allocation3 [shape = 's32[2]{0}', space=sflag, size = 0x8, scoped, tag = 'scoped memory for mlp_forward.1']
    #allocation4 [shape = 'u8[8192]{0}', space=vmem, size = 0x2000, scoped, tag = 'input window, operand 1, single buffered']
    #allocation5 [shape = 's32[1]{0}', space=sflag, size = 0x4, scoped, tag = 'scoped memory for mlp_forward.1']
    #allocation6 [shape = 'u8[65536]{0}', space=vmem, size = 0x10000, scoped, tag = 'input window, operand 3, single buffered']
    #allocation7 [shape = 'u8[65536]{0}', space=vmem, size = 0x10000, scoped, tag = 'input window, operand 5, single buffered']
    #allocation8 [shape = 's32[1]{0}', space=sflag, size = 0x4, scoped, tag = 'scoped memory for mlp_forward.1']
    %12 = vsyncpa [#allocation3], 0
    %s13 = scalar_lea.sflag [#allocation3], 1
    %14 = vsyncpa %s13, 0
    %15 = vsyncpa [#allocation5], 0
    %16 = vsyncpa [#allocation8], 0
    loop: start=0, step=1, limit=4
    $region2: #{mlp_forward.1} parent=1 // loop_pre_header
      _
    $region3: #{mlp_forward.1} parent=1 // loop_header
      %s18 = sphi 0, %s22
      %p19 = scmp.ge.s32.totalorder %s18, 4
      %s28 = sphi 0, %s30
      %s31 = sphi 0, %s28
      %s32 = sphi 0, %s31
      %s48 = sphi 0, %s32
      %s52 = sphi 0, %s52
      %s54 = sphi 0, %s52
      %s55 = sphi 0, %s54
      %s69 = sphi 0, %s55
      %s73 = sphi 0, %s73
      %s75 = sphi 0, %s73
      %s76 = sphi 0, %s75
      %s90 = sphi 0, %s76
      %s94 = sphi 0, %s94
      %s96 = sphi 0, %s94
      %s97 = sphi 0, %s96
      %s111 = sphi 0, %s97
      %s115 = sphi 0, %s115
      %s117 = sphi 0, %s115
      %s118 = sphi 0, %s117
      %s132 = sphi 0, %s118
      %s136 = sphi 0, %s136
      %s138 = sphi 0, %s136
      %s139 = sphi 0, %s138
      %s153 = sphi 0, %s139
      %s157 = sphi 0, %s157
      %s159 = sphi 0, %s157
      %s160 = sphi 0, %s159
      %s174 = sphi 0, %s160
      %s180 = sphi 0, %s182
      %s183 = sphi 0, %s180
      %s184 = sphi 0, %s183
      %s200 = sphi 0, %s184
    $region4: #{mlp_forward.1} parent=1 // loop_header_branch
      %21 = sbr.rel (%p19) target = $region8
    $region5: #{mlp_forward.1} parent=1 // loop_body
      %s23 = ssub.s32 %s18, 1
      %s24 = ssub.s32 %s18, 2
      %s25 = sadd.s32 %s18, 1
      %s26 = ssub.s32 %s18, %s25
      %p27 = scmp.eq.s32.totalorder %s26, 0
      %s29 = sadd.s32 %s28, 1
      %s30 = scalar_select %p27, %s28, %s29
      %p33 = pneg %p27
      %p34 = scmp.eq.s32.totalorder %s18, 1
      %p35 = por %p33, %p34
      %p36 = scmp.ne.s32.totalorder %s28, %s31
      %p37 = scmp.eq.s32.totalorder %s18, 0
      %p38 = por %p36, %p37
      %p39 = scmp.ne.s32.totalorder %s28, %s31
      %p40 = scmp.eq.s32.totalorder %s23, 1
      %p41 = por %p39, %p40
      %p42 = scmp.ne.s32.totalorder %s31, %s32
      %p43 = scmp.eq.s32.totalorder %s23, 0
      %p44 = por %p42, %p43
      %p45 = scmp.ne.s32.totalorder %s31, %s32
      %p46 = scmp.eq.s32.totalorder %s24, 1
      %p47 = por %p45, %p46
      %p49 = scmp.ne.s32.totalorder %s32, %s48
      %p50 = scmp.eq.s32.totalorder %s24, 0
      %p51 = por %p49, %p50
      %s53 = sadd.s32 %s52, 1
      %p56 = scmp.eq.s32.totalorder %s18, 1
      %p57 = scmp.ne.s32.totalorder %s52, %s54
      %p58 = scmp.eq.s32.totalorder %s18, 0
      %p59 = por %p57, %p58
      %p60 = scmp.ne.s32.totalorder %s52, %s54
      %p61 = scmp.eq.s32.totalorder %s23, 1
      %p62 = por %p60, %p61
      %p63 = scmp.ne.s32.totalorder %s54, %s55
      %p64 = scmp.eq.s32.totalorder %s23, 0
      %p65 = por %p63, %p64
      %p66 = scmp.ne.s32.totalorder %s54, %s55
      %p67 = scmp.eq.s32.totalorder %s24, 1
      %p68 = por %p66, %p67
      %p70 = scmp.ne.s32.totalorder %s55, %s69
      %p71 = scmp.eq.s32.totalorder %s24, 0
      %p72 = por %p70, %p71
      %s74 = sadd.s32 %s73, 1
      %p77 = scmp.eq.s32.totalorder %s18, 1
      %p78 = scmp.ne.s32.totalorder %s73, %s75
      %p79 = scmp.eq.s32.totalorder %s18, 0
      %p80 = por %p78, %p79
      %p81 = scmp.ne.s32.totalorder %s73, %s75
      %p82 = scmp.eq.s32.totalorder %s23, 1
      %p83 = por %p81, %p82
      %p84 = scmp.ne.s32.totalorder %s75, %s76
      %p85 = scmp.eq.s32.totalorder %s23, 0
      %p86 = por %p84, %p85
      %p87 = scmp.ne.s32.totalorder %s75, %s76
      %p88 = scmp.eq.s32.totalorder %s24, 1
      %p89 = por %p87, %p88
      %p91 = scmp.ne.s32.totalorder %s76, %s90
      %p92 = scmp.eq.s32.totalorder %s24, 0
      %p93 = por %p91, %p92
      %s95 = sadd.s32 %s94, 1
      %p98 = scmp.eq.s32.totalorder %s18, 1
      %p99 = scmp.ne.s32.totalorder %s94, %s96
      %p100 = scmp.eq.s32.totalorder %s18, 0
      %p101 = por %p99, %p100
      %p102 = scmp.ne.s32.totalorder %s94, %s96
      %p103 = scmp.eq.s32.totalorder %s23, 1
      %p104 = por %p102, %p103
      %p105 = scmp.ne.s32.totalorder %s96, %s97
      %p106 = scmp.eq.s32.totalorder %s23, 0
      %p107 = por %p105, %p106
      %p108 = scmp.ne.s32.totalorder %s96, %s97
      %p109 = scmp.eq.s32.totalorder %s24, 1
      %p110 = por %p108, %p109
      %p112 = scmp.ne.s32.totalorder %s97, %s111
      %p113 = scmp.eq.s32.totalorder %s24, 0
      %p114 = por %p112, %p113
      %s116 = sadd.s32 %s115, 1
      %p119 = scmp.eq.s32.totalorder %s18, 1
      %p120 = scmp.ne.s32.totalorder %s115, %s117
      %p121 = scmp.eq.s32.totalorder %s18, 0
      %p122 = por %p120, %p121
      %p123 = scmp.ne.s32.totalorder %s115, %s117
      %p124 = scmp.eq.s32.totalorder %s23, 1
      %p125 = por %p123, %p124
      %p126 = scmp.ne.s32.totalorder %s117, %s118
      %p127 = scmp.eq.s32.totalorder %s23, 0
      %p128 = por %p126, %p127
      %p129 = scmp.ne.s32.totalorder %s117, %s118
      %p130 = scmp.eq.s32.totalorder %s24, 1
      %p131 = por %p129, %p130
      %p133 = scmp.ne.s32.totalorder %s118, %s132
      %p134 = scmp.eq.s32.totalorder %s24, 0
      %p135 = por %p133, %p134
      %s137 = sadd.s32 %s136, 1
      %p140 = scmp.eq.s32.totalorder %s18, 1
      %p141 = scmp.ne.s32.totalorder %s136, %s138
      %p142 = scmp.eq.s32.totalorder %s18, 0
      %p143 = por %p141, %p142
      %p144 = scmp.ne.s32.totalorder %s136, %s138
      %p145 = scmp.eq.s32.totalorder %s23, 1
      %p146 = por %p144, %p145
      %p147 = scmp.ne.s32.totalorder %s138, %s139
      %p148 = scmp.eq.s32.totalorder %s23, 0
      %p149 = por %p147, %p148
      %p150 = scmp.ne.s32.totalorder %s138, %s139
      %p151 = scmp.eq.s32.totalorder %s24, 1
      %p152 = por %p150, %p151
      %p154 = scmp.ne.s32.totalorder %s139, %s153
      %p155 = scmp.eq.s32.totalorder %s24, 0
      %p156 = por %p154, %p155
      %s158 = sadd.s32 %s157, 1
      %p161 = scmp.eq.s32.totalorder %s18, 1
      %p162 = scmp.ne.s32.totalorder %s157, %s159
      %p163 = scmp.eq.s32.totalorder %s18, 0
      %p164 = por %p162, %p163
      %p165 = scmp.ne.s32.totalorder %s157, %s159
      %p166 = scmp.eq.s32.totalorder %s23, 1
      %p167 = por %p165, %p166
      %p168 = scmp.ne.s32.totalorder %s159, %s160
      %p169 = scmp.eq.s32.totalorder %s23, 0
      %p170 = por %p168, %p169
      %p171 = scmp.ne.s32.totalorder %s159, %s160
      %p172 = scmp.eq.s32.totalorder %s24, 1
      %p173 = por %p171, %p172
      %p175 = scmp.ne.s32.totalorder %s160, %s174
      %p176 = scmp.eq.s32.totalorder %s24, 0
      %p177 = por %p175, %p176
      %s178 = ssub.s32 %s18, %s25
      %p179 = scmp.eq.s32.totalorder %s178, 0
      %s181 = sadd.s32 %s180, 1
      %s182 = scalar_select %p179, %s180, %s181
      %p185 = pneg %p179
      %p186 = scmp.eq.s32.totalorder %s18, 1
      %p187 = por %p185, %p186
      %p188 = scmp.ne.s32.totalorder %s180, %s183
      %p189 = scmp.eq.s32.totalorder %s18, 0
      %p190 = por %p188, %p189
      %p191 = scmp.ne.s32.totalorder %s180, %s183
      %p192 = scmp.eq.s32.totalorder %s23, 1
      %p193 = por %p191, %p192
      %p194 = scmp.ne.s32.totalorder %s183, %s184
      %p195 = scmp.eq.s32.totalorder %s23, 0
      %p196 = por %p194, %p195
      %p197 = scmp.ne.s32.totalorder %s183, %s184
      %p198 = scmp.eq.s32.totalorder %s24, 1
      %p199 = por %p197, %p198
      %p201 = scmp.ne.s32.totalorder %s184, %s200
      %p202 = scmp.eq.s32.totalorder %s24, 0
      %p203 = por %p201, %p202
      %p204 = scmp.le.s32.totalorder 1, %s18
      %p205 = scmp.lt.s32.totalorder %s18, 3
      %p206 = pnand %p204, %p205
      %p207 = pneg %p206
      // Predicated region
      $region9: #{mlp_forward.1} parent=5 // pred_check
        _
      $region10: #{mlp_forward.1} parent=5 // pred_check_branch
        %209 = sbr.rel (%p206) target = $region12
      $region11: #{mlp_forward.1} parent=5 // pred_region
        %s210 = ssub.s32 %s18, 1
        // Predicated region
        $region13: #{mlp_forward.1} parent=11 // pred_check
          %p211 = pneg %p65
        $region14: #{mlp_forward.1} parent=11 // pred_check_branch
          %213 = sbr.rel (%p211) target = $region16
        $region15: #{mlp_forward.1} parent=11 // pred_region
          %s215 = ssub.s32 256, 256
          %216 = vsyncadd [#allocation5], %s215
          %s217 = sshll.u32 [#allocation4], 4
          %s218 = int_to_ptr.vmem [resolvable:$true] %s217
          %223 = dma.hbm_to_vmem [thread:$0]  %s1, 256, %s218, [#allocation5], 128, 128, 8
        $region16: #{mlp_forward.1} parent=11 // pred_fallthru
          _
        // Predicated region
        $region17: #{mlp_forward.1} parent=11 // pred_check
          %p224 = pneg %p86
        $region18: #{mlp_forward.1} parent=11 // pred_check_branch
          %226 = sbr.rel (%p224) target = $region20
        $region19: #{mlp_forward.1} parent=11 // pred_region
          _
        $region20: #{mlp_forward.1} parent=11 // pred_fallthru
          _
        // Predicated region
        $region21: #{mlp_forward.1} parent=11 // pred_check
          %p227 = pneg %p107
        $region22: #{mlp_forward.1} parent=11 // pred_check_branch
          %229 = sbr.rel (%p227) target = $region24
        $region23: #{mlp_forward.1} parent=11 // pred_region
          %s231 = ssub.s32 2048, 2048
          %232 = vsyncadd [#allocation5], %s231
          %s233 = sshll.u32 [#allocation6], 4
          %s234 = int_to_ptr.vmem [resolvable:$true] %s233
          %239 = dma.hbm_to_vmem [thread:$0]  %s3, 2048, %s234, [#allocation5], 128, 128, 8
        $region24: #{mlp_forward.1} parent=11 // pred_fallthru
          _
        // Predicated region
        $region25: #{mlp_forward.1} parent=11 // pred_check
          %p240 = pneg %p128
        $region26: #{mlp_forward.1} parent=11 // pred_check_branch
          %242 = sbr.rel (%p240) target = $region28
        $region27: #{mlp_forward.1} parent=11 // pred_region
          _
        $region28: #{mlp_forward.1} parent=11 // pred_fallthru
          _
        // Predicated region
        $region29: #{mlp_forward.1} parent=11 // pred_check
          %p243 = pneg %p149
        $region30: #{mlp_forward.1} parent=11 // pred_check_branch
          %245 = sbr.rel (%p243) target = $region32
        $region31: #{mlp_forward.1} parent=11 // pred_region
          %s247 = ssub.s32 2048, 2048
          %248 = vsyncadd [#allocation8], %s247
          %s249 = sshll.u32 [#allocation7], 4
          %s250 = int_to_ptr.vmem [resolvable:$true] %s249
          %255 = dma.hbm_to_vmem [thread:$0]  %s5, 2048, %s250, [#allocation8], 128, 128, 8
        $region32: #{mlp_forward.1} parent=11 // pred_fallthru
          _
        // Predicated region
        $region33: #{mlp_forward.1} parent=11 // pred_check
          %p256 = pneg %p170
        $region34: #{mlp_forward.1} parent=11 // pred_check_branch
          %258 = sbr.rel (%p256) target = $region36
        $region35: #{mlp_forward.1} parent=11 // pred_region
          _
        $region36: #{mlp_forward.1} parent=11 // pred_fallthru
          _
      $region12: #{mlp_forward.1} parent=5 // pred_fallthru
        _
      %p259 = scmp.lt.s32.totalorder %s18, 2
      // Predicated region
      $region37: #{mlp_forward.1} parent=5 // pred_check
        %p260 = pneg %p259
      $region38: #{mlp_forward.1} parent=5 // pred_check_branch
        %262 = sbr.rel (%p260) target = $region40
      $region39: #{mlp_forward.1} parent=5 // pred_region
        // Predicated region
        $region41: #{mlp_forward.1} parent=39 // pred_check
          %p263 = pneg %p38
        $region42: #{mlp_forward.1} parent=39 // pred_check_branch
          %265 = sbr.rel (%p263) target = $region44
        $region43: #{mlp_forward.1} parent=39 // pred_region
          %s266 = sand.u32 %s28, 1
          %s267 = scalar_lea.sflag [#allocation3], %s266
          %s268 = sand.u32 %s28, 1
          %s269 = smul.addr %s268, 8
          %s270 = scalar_lea.vmem [#allocation2], %s269
          %s272 = ssub.s32 128, 128
          %273 = vsyncadd %s267, %s272
          %s274 = smul.addr %s18, 128
          %s275 = scalar_lea.hbm %s0, %s274
          %s277 = sshll.u32 %s270, 4
          %s278 = int_to_ptr.vmem [resolvable:$true] %s277
          %280 = dma.hbm_to_vmem [thread:$0]  %s275, 128, %s278, %s267
        $region44: #{mlp_forward.1} parent=39 // pred_fallthru
          _
      $region40: #{mlp_forward.1} parent=5 // pred_fallthru
        _
      %p281 = scmp.le.s32.totalorder 1, %s18
      %p282 = scmp.lt.s32.totalorder %s18, 3
      %p283 = pnand %p281, %p282
      %p284 = pneg %p283
      // Predicated region
      $region45: #{mlp_forward.1} parent=5 // pred_check
        _
      $region46: #{mlp_forward.1} parent=5 // pred_check_branch
        %286 = sbr.rel (%p283) target = $region48
      $region47: #{mlp_forward.1} parent=5 // pred_region
        %s287 = ssub.s32 %s18, 1
        %s288 = sand.u32 %s31, 1
        %s289 = scalar_lea.sflag [#allocation3], %s288
        %s290 = sand.u32 %s31, 1
        %s291 = smul.addr %s290, 8
        %s292 = scalar_lea.vmem [#allocation2], %s291
        // Predicated region
        $region49: #{mlp_forward.1} parent=47 // pred_check
          %p293 = pneg %p44
        $region50: #{mlp_forward.1} parent=47 // pred_check_branch
          %295 = sbr.rel (%p293) target = $region52
        $region51: #{mlp_forward.1} parent=47 // pred_region
          %296 = dma.done %s289, 128
        $region52: #{mlp_forward.1} parent=47 // pred_fallthru
          _
        // Predicated region
        $region53: #{mlp_forward.1} parent=47 // pred_check
          %p297 = pneg %p65
        $region54: #{mlp_forward.1} parent=47 // pred_check_branch
          %299 = sbr.rel (%p297) target = $region56
        $region55: #{mlp_forward.1} parent=47 // pred_region
          %300 = dma.done [#allocation5], 256
        $region56: #{mlp_forward.1} parent=47 // pred_fallthru
          _
        // Predicated region
        $region57: #{mlp_forward.1} parent=47 // pred_check
          %p301 = pneg %p107
        $region58: #{mlp_forward.1} parent=47 // pred_check_branch
          %303 = sbr.rel (%p301) target = $region60
        $region59: #{mlp_forward.1} parent=47 // pred_region
          %304 = dma.done [#allocation5], 2048
        $region60: #{mlp_forward.1} parent=47 // pred_fallthru
          _
        // Predicated region
        $region61: #{mlp_forward.1} parent=47 // pred_check
          %p305 = pneg %p149
        $region62: #{mlp_forward.1} parent=47 // pred_check_branch
          %307 = sbr.rel (%p305) target = $region64
        $region63: #{mlp_forward.1} parent=47 // pred_region
          %308 = dma.done [#allocation8], 2048
        $region64: #{mlp_forward.1} parent=47 // pred_fallthru
          _
        %s309 = sand.u32 %s31, 1
        %s310 = scalar_lea.sflag [#allocation3], %s309
        %s311 = sand.u32 %s31, 1
        %s312 = smul.addr %s311, 8
        %s313 = scalar_lea.vmem [#allocation2], %s312
        %p314 = pneg %p44
        %p315 = pneg %p41
        %p316 = pneg %p65
        %p317 = pneg %p62
        %p318 = pneg %p86
        %p319 = pneg %p83
        %p320 = pneg %p107
        %p321 = pneg %p104
        %p322 = pneg %p128
        %p323 = pneg %p125
        %p324 = pneg %p149
        %p325 = pneg %p146
        %p326 = pneg %p170
        %p327 = pneg %p167
        %p328 = pneg %p196
        %p329 = pneg %p193
        %p330 = scmp.lt.s32.totalorder %s23, 1
        %s331 = scalar_select %p330, %s23, 1
        %s332 = smul.addr %s331, 8
        %s333 = scalar_lea.vmem %s7, %s332
        %p334 = scmp.lt.s32.totalorder %s23, 1
        %s335 = scalar_select %p334, %s23, 1
        %s336 = smul.addr %s335, 8
        %s337 = scalar_lea.vmem %s7, %s336
        %v338 = vld [vmem:[%s292] sm:$0xff]
        %v339 = vld [vmem:[#allocation4] sm:$0xff]
        %v340 = vld [vmem:[#allocation4 + $0x8] sm:$0xff]
        %v341 = vld [vmem:[%s2] sm:$0x1]
        %v343 = vlaneseq
        %v344 = vshrl.u32 %v343, 7
        %v345 = vsub.s32 0, %v344
        %v346 = vrot.slane %v341, %v345
        %vm348 = vcmask 130048
        %v350 = vsel %vm348, %v338, 0
        %352 = vmatprep.subr.mxu0 0.0
        %353 = vmatpush1.msra.mxu0 %v339
        %354 = vmatprep.subr.mxu0 0.0
        %355 = vmatpush1.msra.mxu0 %v340
        %356 = vmatprep.subr.mxu0 0.0
        %357 = vmatpush1.msra.mxu0 0.0
        %358 = vmatprep.subr.mxu0 0.0
        %359 = vmatpush1.msra.mxu0 0.0
        %360 = vmatprep.subr.mxu0 0.0
        %361 = vmatpush1.msra.mxu0 0.0
        %362 = vmatprep.subr.mxu0 0.0
        %363 = vmatpush1.msra.mxu0 0.0
        %364 = vmatprep.subr.mxu0 0.0
        %365 = vmatpush1.msra.mxu0 0.0
        %366 = vmatprep.subr.mxu0 0.0
        %367 = vmatpush1.msra.mxu0 0.0
        %368 = vmatprep.subr.mxu0 0.0
        %369 = vmatpush1.msra.mxu0 0.0
        %370 = vmatprep.subr.mxu0 0.0
        %371 = vmatpush1.msra.mxu0 0.0
        %372 = vmatprep.subr.mxu0 0.0
        %373 = vmatpush1.msra.mxu0 0.0
        %374 = vmatprep.subr.mxu0 0.0
        %375 = vmatpush1.msra.mxu0 0.0
        %376 = vmatprep.subr.mxu0 0.0
        %377 = vmatpush1.msra.mxu0 0.0
        %378 = vmatprep.subr.mxu0 0.0
        %379 = vmatpush1.msra.mxu0 0.0
        %380 = vmatprep.subr.mxu0 0.0
        %381 = vmatpush1.msra.mxu0 0.0
        %382 = vmatprep.subr.mxu0 0.0
        %383 = vmatpush1.msra.mxu0 0.0
        %384 = vmatprep.subr.mxu0 0.0
        %385 = vmatpush1.msra.mxu0 0.0
        %386 = vmatprep.subr.mxu0 0.0
        %387 = vmatpush1.msra.mxu0 0.0
        %388 = vmatprep.subr.mxu0 0.0
        %389 = vmatpush1.msra.mxu0 0.0
        %390 = vmatprep.subr.mxu0 0.0
        %391 = vmatpush1.msra.mxu0 0.0
        %392 = vmatprep.subr.mxu0 0.0
        %393 = vmatpush1.msra.mxu0 0.0
        %394 = vmatprep.subr.mxu0 0.0
        %395 = vmatpush1.msra.mxu0 0.0
        %396 = vmatprep.subr.mxu0 0.0
        %397 = vmatpush1.msra.mxu0 0.0
        %398 = vmatprep.subr.mxu0 0.0
        %399 = vmatpush1.msra.mxu0 0.0
        %400 = vmatprep.subr.mxu0 0.0
        %401 = vmatpush1.msra.mxu0 0.0
        %402 = vmatprep.subr.mxu0 0.0
        %403 = vmatpush1.msra.mxu0 0.0
        %404 = vmatprep.subr.mxu0 0.0
        %405 = vmatpush1.msra.mxu0 0.0
        %406 = vmatprep.subr.mxu0 0.0
        %407 = vmatpush1.msra.mxu0 0.0
        %408 = vmatprep.subr.mxu0 0.0
        %409 = vmatpush1.msra.mxu0 0.0
        %410 = vmatprep.subr.mxu0 0.0
        %411 = vmatpush1.msra.mxu0 0.0
        %412 = vmatprep.subr.mxu0 0.0
        %413 = vmatpush1.msra.mxu0 0.0
        %414 = vmatprep.subr.mxu0 0.0
        %415 = vmatpush1.msra.mxu0 0.0
        %416 = vmatprep.mubr.f32.mxu0 0.0
        %417 = vmatmul.mubr.f32.gmra.mrb[0].mxu0 %v350
        %v418 = vpop.f32.mrb[0].mxu0
        %v419 = vadd.f32 %v346, %v418
        %v420 = vpop.f32.mrb[0].mxu0
        %421 = vdwg.mxu0
        %v422 = vmax.f32 %v419, 0.0
        %v423 = vld [vmem:[#allocation6] sm:$0xff]
        %v424 = vld [vmem:[#allocation6 + $0x8] sm:$0xff]
        %v425 = vld [vmem:[#allocation6 + $0x10] sm:$0xff]
        %v426 = vld [vmem:[#allocation6 + $0x18] sm:$0xff]
        %v427 = vld [vmem:[#allocation6 + $0x20] sm:$0xff]
        %v428 = vld [vmem:[#allocation6 + $0x28] sm:$0xff]
        %v429 = vld [vmem:[#allocation6 + $0x30] sm:$0xff]
        %v430 = vld [vmem:[#allocation6 + $0x38] sm:$0xff]
        %v431 = vld [vmem:[#allocation6 + $0x40] sm:$0xff]
        %v432 = vld [vmem:[#allocation6 + $0x48] sm:$0xff]
        %v433 = vld [vmem:[#allocation6 + $0x50] sm:$0xff]
        %v434 = vld [vmem:[#allocation6 + $0x58] sm:$0xff]
        %v435 = vld [vmem:[#allocation6 + $0x60] sm:$0xff]
        %v436 = vld [vmem:[#allocation6 + $0x68] sm:$0xff]
        %v437 = vld [vmem:[#allocation6 + $0x70] sm:$0xff]
        %v438 = vld [vmem:[#allocation6 + $0x78] sm:$0xff]
        %v439 = vld [vmem:[%s4] sm:$0x1]
        %v441 = vlaneseq
        %v442 = vshrl.u32 %v441, 7
        %v443 = vsub.s32 0, %v442
        %v444 = vrot.slane %v439, %v443
        %446 = vmatprep.subr.mxu0 0.0
        %447 = vmatpush1.msra.mxu0 %v423
        %448 = vmatprep.subr.mxu0 0.0
        %449 = vmatpush1.msra.mxu0 %v424
        %450 = vmatprep.subr.mxu0 0.0
        %451 = vmatpush1.msra.mxu0 %v425
        %452 = vmatprep.subr.mxu0 0.0
        %453 = vmatpush1.msra.mxu0 %v426
        %454 = vmatprep.subr.mxu0 0.0
        %455 = vmatpush1.msra.mxu0 %v427
        %456 = vmatprep.subr.mxu0 0.0
        %457 = vmatpush1.msra.mxu0 %v428
        %458 = vmatprep.subr.mxu0 0.0
        %459 = vmatpush1.msra.mxu0 %v429
        %460 = vmatprep.subr.mxu0 0.0
        %461 = vmatpush1.msra.mxu0 %v430
        %462 = vmatprep.subr.mxu0 0.0
        %463 = vmatpush1.msra.mxu0 %v431
        %464 = vmatprep.subr.mxu0 0.0
        %465 = vmatpush1.msra.mxu0 %v432
        %466 = vmatprep.subr.mxu0 0.0
        %467 = vmatpush1.msra.mxu0 %v433
        %468 = vmatprep.subr.mxu0 0.0
        %469 = vmatpush1.msra.mxu0 %v434
        %470 = vmatprep.subr.mxu0 0.0
        %471 = vmatpush1.msra.mxu0 %v435
        %472 = vmatprep.subr.mxu0 0.0
        %473 = vmatpush1.msra.mxu0 %v436
        %474 = vmatprep.subr.mxu0 0.0
        %475 = vmatpush1.msra.mxu0 %v437
        %476 = vmatprep.subr.mxu0 0.0
        %477 = vmatpush1.msra.mxu0 %v438
        %478 = vmatprep.subr.mxu0 0.0
        %479 = vmatpush1.msra.mxu0 0.0
        %480 = vmatprep.subr.mxu0 0.0
        %481 = vmatpush1.msra.mxu0 0.0
        %482 = vmatprep.subr.mxu0 0.0
        %483 = vmatpush1.msra.mxu0 0.0
        %484 = vmatprep.subr.mxu0 0.0
        %485 = vmatpush1.msra.mxu0 0.0
        %486 = vmatprep.subr.mxu0 0.0
        %487 = vmatpush1.msra.mxu0 0.0
        %488 = vmatprep.subr.mxu0 0.0
        %489 = vmatpush1.msra.mxu0 0.0
        %490 = vmatprep.subr.mxu0 0.0
        %491 = vmatpush1.msra.mxu0 0.0
        %492 = vmatprep.subr.mxu0 0.0
        %493 = vmatpush1.msra.mxu0 0.0
        %494 = vmatprep.subr.mxu0 0.0
        %495 = vmatpush1.msra.mxu0 0.0
        %496 = vmatprep.subr.mxu0 0.0
        %497 = vmatpush1.msra.mxu0 0.0
        %498 = vmatprep.subr.mxu0 0.0
        %499 = vmatpush1.msra.mxu0 0.0
        %500 = vmatprep.subr.mxu0 0.0
        %501 = vmatpush1.msra.mxu0 0.0
        %502 = vmatprep.subr.mxu0 0.0
        %503 = vmatpush1.msra.mxu0 0.0
        %504 = vmatprep.subr.mxu0 0.0
        %505 = vmatpush1.msra.mxu0 0.0
        %506 = vmatprep.subr.mxu0 0.0
        %507 = vmatpush1.msra.mxu0 0.0
        %508 = vmatprep.subr.mxu0 0.0
        %509 = vmatpush1.msra.mxu0 0.0
        %510 = vmatprep.mubr.f32.mxu0 0.0
        %511 = vmatmul.mubr.f32.gmra.mrb[0].mxu0 %v422
        %v512 = vpop.f32.mrb[0].mxu0
        %v513 = vadd.f32 %v444, %v512
        %v514 = vpop.f32.mrb[0].mxu0
        %515 = vdwg.mxu0
        %v516 = vmax.f32 %v513, 0.0
        %v517 = vld [vmem:[#allocation7] sm:$0xff]
        %v518 = vld [vmem:[#allocation7 + $0x8] sm:$0xff]
        %v519 = vld [vmem:[#allocation7 + $0x10] sm:$0xff]
        %v520 = vld [vmem:[#allocation7 + $0x18] sm:$0xff]
        %v521 = vld [vmem:[#allocation7 + $0x20] sm:$0xff]
        %v522 = vld [vmem:[#allocation7 + $0x28] sm:$0xff]
        %v523 = vld [vmem:[#allocation7 + $0x30] sm:$0xff]
        %v524 = vld [vmem:[#allocation7 + $0x38] sm:$0xff]
        %v525 = vld [vmem:[#allocation7 + $0x40] sm:$0xff]
        %v526 = vld [vmem:[#allocation7 + $0x48] sm:$0xff]
        %v527 = vld [vmem:[#allocation7 + $0x50] sm:$0xff]
        %v528 = vld [vmem:[#allocation7 + $0x58] sm:$0xff]
        %v529 = vld [vmem:[#allocation7 + $0x60] sm:$0xff]
        %v530 = vld [vmem:[#allocation7 + $0x68] sm:$0xff]
        %v531 = vld [vmem:[#allocation7 + $0x70] sm:$0xff]
        %v532 = vld [vmem:[#allocation7 + $0x78] sm:$0xff]
        %v533 = vld [vmem:[%s6] sm:$0x1]
        %v535 = vlaneseq
        %v536 = vshrl.u32 %v535, 7
        %v537 = vsub.s32 0, %v536
        %v538 = vrot.slane %v533, %v537
        %540 = vmatprep.subr.mxu0 0.0
        %541 = vmatpush1.msra.mxu0 %v517
        %542 = vmatprep.subr.mxu0 0.0
        %543 = vmatpush1.msra.mxu0 %v518
        %544 = vmatprep.subr.mxu0 0.0
        %545 = vmatpush1.msra.mxu0 %v519
        %546 = vmatprep.subr.mxu0 0.0
        %547 = vmatpush1.msra.mxu0 %v520
        %548 = vmatprep.subr.mxu0 0.0
        %549 = vmatpush1.msra.mxu0 %v521
        %550 = vmatprep.subr.mxu0 0.0
        %551 = vmatpush1.msra.mxu0 %v522
        %552 = vmatprep.subr.mxu0 0.0
        %553 = vmatpush1.msra.mxu0 %v523
        %554 = vmatprep.subr.mxu0 0.0
        %555 = vmatpush1.msra.mxu0 %v524
        %556 = vmatprep.subr.mxu0 0.0
        %557 = vmatpush1.msra.mxu0 %v525
        %558 = vmatprep.subr.mxu0 0.0
        %559 = vmatpush1.msra.mxu0 %v526
        %560 = vmatprep.subr.mxu0 0.0
        %561 = vmatpush1.msra.mxu0 %v527
        %562 = vmatprep.subr.mxu0 0.0
        %563 = vmatpush1.msra.mxu0 %v528
        %564 = vmatprep.subr.mxu0 0.0
        %565 = vmatpush1.msra.mxu0 %v529
        %566 = vmatprep.subr.mxu0 0.0
        %567 = vmatpush1.msra.mxu0 %v530
        %568 = vmatprep.subr.mxu0 0.0
        %569 = vmatpush1.msra.mxu0 %v531
        %570 = vmatprep.subr.mxu0 0.0
        %571 = vmatpush1.msra.mxu0 %v532
        %572 = vmatprep.subr.mxu0 0.0
        %573 = vmatpush1.msra.mxu0 0.0
        %574 = vmatprep.subr.mxu0 0.0
        %575 = vmatpush1.msra.mxu0 0.0
        %576 = vmatprep.subr.mxu0 0.0
        %577 = vmatpush1.msra.mxu0 0.0
        %578 = vmatprep.subr.mxu0 0.0
        %579 = vmatpush1.msra.mxu0 0.0
        %580 = vmatprep.subr.mxu0 0.0
        %581 = vmatpush1.msra.mxu0 0.0
        %582 = vmatprep.subr.mxu0 0.0
        %583 = vmatpush1.msra.mxu0 0.0
        %584 = vmatprep.subr.mxu0 0.0
        %585 = vmatpush1.msra.mxu0 0.0
        %586 = vmatprep.subr.mxu0 0.0
        %587 = vmatpush1.msra.mxu0 0.0
        %588 = vmatprep.subr.mxu0 0.0
        %589 = vmatpush1.msra.mxu0 0.0
        %590 = vmatprep.subr.mxu0 0.0
        %591 = vmatpush1.msra.mxu0 0.0
        %592 = vmatprep.subr.mxu0 0.0
        %593 = vmatpush1.msra.mxu0 0.0
        %594 = vmatprep.subr.mxu0 0.0
        %595 = vmatpush1.msra.mxu0 0.0
        %596 = vmatprep.subr.mxu0 0.0
        %597 = vmatpush1.msra.mxu0 0.0
        %598 = vmatprep.subr.mxu0 0.0
        %599 = vmatpush1.msra.mxu0 0.0
        %600 = vmatprep.subr.mxu0 0.0
        %601 = vmatpush1.msra.mxu0 0.0
        %602 = vmatprep.subr.mxu0 0.0
        %603 = vmatpush1.msra.mxu0 0.0
        %604 = vmatprep.mubr.f32.mxu0 0.0
        %605 = vmatmul.mubr.f32.gmra.mrb[0].mxu0 %v516
        %v606 = vpop.f32.mrb[0].mxu0
        %v607 = vadd.f32 %v538, %v606
        %v608 = vpop.f32.mrb[0].mxu0
        %609 = vdwg.mxu0
        %610 = vst [vmem:[%s337] sm:$0xff] %v607
        %p611 = scmp.lt.s32.totalorder %s23, 1
        %s612 = scalar_select %p611, %s23, 1
        %s613 = smul.addr %s612, 8
        %s614 = scalar_lea.vmem %s7, %s613
        // Predicated region
        $region65: #{mlp_forward.1} parent=47 // pred_check
          %p615 = pneg %p193
        $region66: #{mlp_forward.1} parent=47 // pred_check_branch
          %617 = sbr.rel (%p615) target = $region68
        $region67: #{mlp_forward.1} parent=47 // pred_region
          _
        $region68: #{mlp_forward.1} parent=47 // pred_fallthru
          _
      $region48: #{mlp_forward.1} parent=5 // pred_fallthru
        _
      %p618 = scmp.le.s32.totalorder 2, %s18
      // Predicated region
      $region69: #{mlp_forward.1} parent=5 // pred_check
        %p619 = pneg %p618
      $region70: #{mlp_forward.1} parent=5 // pred_check_branch
        %621 = sbr.rel (%p619) target = $region72
      $region71: #{mlp_forward.1} parent=5 // pred_region
        %s622 = ssub.s32 %s18, 2
        // Predicated region
        $region73: #{mlp_forward.1} parent=71 // pred_check
          %p623 = pneg %p199
        $region74: #{mlp_forward.1} parent=71 // pred_check_branch
          %625 = sbr.rel (%p623) target = $region76
        $region75: #{mlp_forward.1} parent=71 // pred_region
          %p626 = scmp.lt.s32.totalorder %s24, 1
          %s627 = scalar_select %p626, %s24, 1
          %s628 = smul.addr %s627, 8
          %s629 = scalar_lea.vmem %s7, %s628
        $region76: #{mlp_forward.1} parent=71 // pred_fallthru
          _
      $region72: #{mlp_forward.1} parent=5 // pred_fallthru
        _
    $region6: #{mlp_forward.1} parent=1 // loop_footer
      %s22 = sadd.s32 1, %s18
    $region7: #{mlp_forward.1} parent=1 // loop_footer_branch
      %17 = sbr.rel target = $region3
    $region8: #{mlp_forward.1} parent=1 // loop_exit
      _
    %630 = vsyncpa [#allocation3], 1
    %s631 = scalar_lea.sflag [#allocation3], 1
    %632 = vsyncpa %s631, 1
    %633 = vsyncpa [#allocation5], 1
    %634 = vsyncpa [#allocation8], 1

</llo_original>
